<compile_context>
chip_gen: v7x
topology: tpu7x:2x2x1
jax: 0.10.0
libtpu: 0.0.40
codegen_flags: <defaults>
</compile_context>

<pallas_src>
import functools

import jax
import jax.numpy as jnp
from jax import lax
from jax.experimental import pallas as pl
from jax.experimental.pallas import tpu as pltpu


def _round_up(x: int, m: int) -> int:
    return (x + m - 1) // m * m


def _lrp_linear_kernel(a_ref, r_ref, w_ref, out_ref, *, eps, clamp_w, approx_recip):
    """Bias-free path (z_plus mode drops the identically-zero bias DMA stream)."""
    a = a_ref[...].astype(jnp.float32)          # [TM, INp]
    r = r_ref[...].astype(jnp.float32)          # [TM, OUTp]
    w = w_ref[...].astype(jnp.float32)          # [OUTp, INp]
    if clamp_w:
        # z+ clamp fused in-kernel: a VPU op hidden under the MXU, instead of an
        # extra full-weight HBM pass (jnp.clip) in the wrapper.
        w = jnp.maximum(w, 0.0)

    # z = a @ W^T + eps, expressed as a transposed contraction so no W.T copy is
    # materialized in VMEM on every grid step.
    z = lax.dot_general(a, w, (((1,), (1,)), ((), ())),
                        preferred_element_type=jnp.float32) + eps
    if approx_recip:
        s = r * pl.reciprocal(z, approx=True)   # EUP slot -> effectively free
    else:
        s = r / z
    c = jnp.dot(s, w, preferred_element_type=jnp.float32)      # [TM, INp]
    out_ref[...] = (a * c).astype(out_ref.dtype)


def _lrp_linear_bias_kernel(a_ref, r_ref, w_ref, b_ref, out_ref, *, eps, approx_recip):
    """Generic-mode path: keeps the layer bias in the forward pass."""
    a = a_ref[...].astype(jnp.float32)          # [TM, INp]
    r = r_ref[...].astype(jnp.float32)          # [TM, OUTp]
    w = w_ref[...].astype(jnp.float32)          # [OUTp, INp]
    b = b_ref[...].astype(jnp.float32)          # [1, OUTp]
    z = lax.dot_general(a, w, (((1,), (1,)), ((), ())),
                        preferred_element_type=jnp.float32) + b + eps
    if approx_recip:
        s = r * pl.reciprocal(z, approx=True)
    else:
        s = r / z
    c = jnp.dot(s, w, preferred_element_type=jnp.float32)
    out_ref[...] = (a * c).astype(out_ref.dtype)


def lrp_linear(a, r, weight, bias=None, *, eps=1e-5, mode="z_plus", top_k=0.0,
               block_rows=512, approx_recip=True):
    """Pallas implementation of RelevancePropagationLinear.forward.

    a:      [N, IN]   activations entering the linear layer
    r:      [N, OUT]  relevance at the layer's output
    weight: [OUT, IN] nn.Linear weight
    bias:   [OUT]     nn.Linear bias (ignored / zeroed in z_plus mode)
    """
    # TODO(synk): top_k relevance_filter (top-k% masking of r) not implemented;
    # the module default top_k=0.0 skips it.
    N, IN = a.shape
    OUT, IN2 = weight.shape
    assert IN == IN2 and r.shape == (N, OUT)

    use_bias = (mode != "z_plus") and (bias is not None)

    # Lane-dense padding: feature dims -> multiples of 128 so MXU passes are full
    # width and output stores are unmasked; batch -> multiple of the row tile
    # (itself a multiple of 8 f32 sublanes).
    INp = _round_up(IN, 128)
    OUTp = _round_up(OUT, 128)
    TM = min(_round_up(block_rows, 8), _round_up(N, 8))
    Np = _round_up(N, TM)

    a_p = jnp.pad(a, ((0, Np - N), (0, INp - IN)))
    r_p = jnp.pad(r, ((0, Np - N), (0, OUTp - OUT)))
    w_p = jnp.pad(weight, ((0, OUTp - OUT), (0, INp - IN)))

    in_specs = [
        pl.BlockSpec((TM, INp), lambda i: (i, 0)),     # a tile (pipelined)
        pl.BlockSpec((TM, OUTp), lambda i: (i, 0)),    # r tile (pipelined)
        pl.BlockSpec((OUTp, INp), lambda i: (0, 0)),   # weight (grid-invariant, resident)
    ]
    inputs = [a_p, r_p, w_p]

    if use_bias:
        b_p = jnp.pad(jnp.asarray(bias).reshape(1, OUT), ((0, 0), (0, OUTp - OUT)))
        in_specs.append(pl.BlockSpec((1, OUTp), lambda i: (0, 0)))
        inputs.append(b_p)
        kernel = functools.partial(_lrp_linear_bias_kernel, eps=eps,
                                   approx_recip=approx_recip)
    else:
        # z_plus: bias is identically zero -> drop the DMA stream entirely and
        # fuse the weight clamp into the kernel.
        kernel = functools.partial(_lrp_linear_kernel, eps=eps,
                                   clamp_w=(mode == "z_plus"),
                                   approx_recip=approx_recip)

    # Scoped-VMEM budget: resident weight (+bias) and the a/r/out tiles are
    # double-buffered by the pipeliner. Only raise the limit when the default
    # would be exceeded, and clamp to 64 MiB so the request still fits v7x.
    footprint = 4 * (2 * OUTp * INp
                     + (2 * OUTp if use_bias else 0)
                     + 2 * TM * (2 * INp + OUTp))
    ckw = dict(dimension_semantics=("parallel",))
    if footprint > (16 << 20):
        ckw["vmem_limit_bytes"] = int(min(footprint + (8 << 20), 64 << 20))

    out_p = pl.pallas_call(
        kernel,
        out_shape=jax.ShapeDtypeStruct((Np, INp), a.dtype),
        grid_spec=pltpu.PrefetchScalarGridSpec(
            num_scalar_prefetch=0,
            grid=(Np // TM,),
            in_specs=in_specs,
            out_specs=pl.BlockSpec((TM, INp), lambda i: (i, 0)),
        ),
        compiler_params=pltpu.CompilerParams(**ckw),
    )(*inputs)

    return out_p[:N, :IN]


def _reference(a, r, weight, bias, eps=1e-5, mode="z_plus"):
    if mode == "z_plus":
        weight = jnp.maximum(weight, 0.0)
        bias = jnp.zeros_like(bias)
    z = a @ weight.T + bias + eps
    s = r / z
    c = s @ weight
    return a * c


if __name__ == "__main__":
    # Small shapes implied by the forward: a: [N, IN], r: [N, OUT].
    # Non-multiples of 128 on purpose, to exercise the padding path.
    N, IN, OUT = 8, 32, 64
    key = jax.random.PRNGKey(0)
    k1, k2, k3, k4 = jax.random.split(key, 4)

    # Deterministic synthetic parameters / inputs (no checkpoint loading).
    a = jax.random.uniform(k1, (N, IN), dtype=jnp.float32)       # activations (>=0, post-ReLU-like)
    r = jax.random.uniform(k2, (N, OUT), dtype=jnp.float32)      # incoming relevance
    weight = jax.random.normal(k3, (OUT, IN), dtype=jnp.float32) * 0.1
    bias = jax.random.normal(k4, (OUT,), dtype=jnp.float32) * 0.1

    out = lrp_linear(a, r, weight, bias, eps=1e-5, mode="z_plus")
    out = jax.block_until_ready(out)

    ref = _reference(a, r, weight, bias, eps=1e-5, mode="z_plus")
    assert out.shape == (N, IN)
    # Tolerance accounts for the EUP approx-reciprocal (~2^-12 relative error).
    assert jnp.allclose(out, ref, atol=1e-3, rtol=2e-3), "mismatch vs reference"

    print("KERNEL_OK")
</pallas_src>

<mosaic_0001>
module attributes {stable_mosaic.version = 11 : i64} {
  func.func @_lrp_linear_kernel(%arg0: i32, %arg1: memref<8x128xf32, #tpu.memory_space<vmem>>, %arg2: memref<8x128xf32, #tpu.memory_space<vmem>>, %arg3: memref<128x128xf32, #tpu.memory_space<vmem>>, %arg4: memref<8x128xf32, #tpu.memory_space<vmem>>) attributes {dimension_semantics = [#tpu.dimension_semantics<parallel>], iteration_bounds = array<i64: 1>, scalar_prefetch = 0 : i64, scratch_operands = 0 : i64, tpu.core_type = #tpu.core_type<tc>, window_params = [{transform_indices = @transform_0, window_bounds = array<i64: 8, 128>}, {transform_indices = @transform_1, window_bounds = array<i64: 8, 128>}, {pipeline_mode = #tpu.pipeline_mode<synchronous>, transform_indices = @transform_2, window_bounds = array<i64: 128, 128>}, {transform_indices = @transform_3, window_bounds = array<i64: 8, 128>}]} {
    %c0 = arith.constant 0 : index
    %c0_0 = arith.constant 0 : index
    %0 = vector.load %arg1[%c0, %c0_0] : memref<8x128xf32, #tpu.memory_space<vmem>>, vector<8x128xf32>
    %c0_1 = arith.constant 0 : index
    %c0_2 = arith.constant 0 : index
    %1 = vector.load %arg2[%c0_1, %c0_2] : memref<8x128xf32, #tpu.memory_space<vmem>>, vector<8x128xf32>
    %c0_3 = arith.constant 0 : index
    %c0_4 = arith.constant 0 : index
    %2 = vector.load %arg3[%c0_3, %c0_4] : memref<128x128xf32, #tpu.memory_space<vmem>>, vector<128x128xf32>
    %cst = arith.constant 0.000000e+00 : f32
    %3 = vector.broadcast %cst : f32 to vector<128x128xf32>
    %4 = arith.maximumf %2, %3 : vector<128x128xf32>
    %cst_5 = arith.constant dense<0.000000e+00> : vector<8x128xf32>
    %5 = tpu.matmul %0, %4, %cst_5 {dimension_numbers = #tpu.dot_dimension_numbers<[1], [1], [0], [0], [0, 0, 1, 0], [], []>} : vector<8x128xf32>, vector<128x128xf32>, vector<8x128xf32> -> vector<8x128xf32>
    %cst_6 = arith.constant 9.99999974E-6 : f32
    %6 = vector.broadcast %cst_6 : f32 to vector<8x128xf32>
    %7 = arith.addf %5, %6 : vector<8x128xf32>
    %8 = tpu.reciprocal %7 {approx = true} : vector<8x128xf32> -> vector<8x128xf32>
    %9 = arith.mulf %1, %8 : vector<8x128xf32>
    %cst_7 = arith.constant dense<0.000000e+00> : vector<8x128xf32>
    %10 = tpu.matmul %9, %4, %cst_7 {dimension_numbers = #tpu.dot_dimension_numbers<[1], [0], [0], [1], [0, 0, 1, 1], [], []>} : vector<8x128xf32>, vector<128x128xf32>, vector<8x128xf32> -> vector<8x128xf32>
    %11 = arith.mulf %0, %10 : vector<8x128xf32>
    %c0_8 = arith.constant 0 : index
    %c0_9 = arith.constant 0 : index
    %12 = vector.load %arg4[%c0_8, %c0_9] : memref<8x128xf32, #tpu.memory_space<vmem>>, vector<8x128xf32>
    tpu.vector_store %arg4[%c0_8, %c0_9], %11 {strides = array<i32>} : memref<8x128xf32, #tpu.memory_space<vmem>>, vector<8x128xf32>,
    return
  }
  func.func @transform_0(%arg0: i32) -> (i32, i32) {
    %c0_i32 = arith.constant 0 : i32
    %c0_i32_0 = arith.constant 0 : i32
    return %arg0, %c0_i32 : i32, i32
  }
  func.func @transform_1(%arg0: i32) -> (i32, i32) {
    %c0_i32 = arith.constant 0 : i32
    %c0_i32_0 = arith.constant 0 : i32
    return %arg0, %c0_i32 : i32, i32
  }
  func.func @transform_2(%arg0: i32) -> (i32, i32) {
    %c0_i32 = arith.constant 0 : i32
    %c0_i32_0 = arith.constant 0 : i32
    %c0_i32_1 = arith.constant 0 : i32
    return %c0_i32, %c0_i32_0 : i32, i32
  }
  func.func @transform_3(%arg0: i32) -> (i32, i32) {
    %c0_i32 = arith.constant 0 : i32
    %c0_i32_0 = arith.constant 0 : i32
    return %arg0, %c0_i32 : i32, i32
  }
}

</mosaic_0001>

<llo_original>
// kernel: tpu_custom_call.1
$region0: #{tpu_custom_call.1}
  #allocation0 [shape = 'u32[]', space=smem, size = 0x4, offset = 0x4, fixed_abs, tag = 'smem constant byte address 0x4 - core index']
  #allocation1 [shape = 'u32[144,128]{1,0:T(1,128)}', space=vmem, size = 0x12000, scoped, tag = 'internal scratch']
  %s0 = inlined_call_operand.hbm [shape: f32[8,128], index: 0, kind: input, shape index: {}]
  %s1 = inlined_call_operand.hbm [shape: f32[8,128], index: 1, kind: input, shape index: {}]
  %s2 = inlined_call_operand.hbm [shape: f32[128,128], index: 2, kind: input, shape index: {}]
  %s3 = inlined_call_operand.hbm [shape: f32[8,128], index: 3, kind: output, shape index: {}]
  %s4 = sld [smem:[#allocation0]]
  $region34: #{tpu_custom_call.1} parent=0
    _
  %s6 = ssub.s32 1, %s4
  %s7 = scalar_select 0, %s6, %s4
  $region1: #{tpu_custom_call.1} parent=0
    #allocation2 [shape = 'u8[4096]{0}', space=vmem, size = 0x1000, scoped, tag = 'input window, operand 0, single buffered']
    #allocation3 [shape = 's32[1]{0}', space=sflag, size = 0x4, scoped, tag = 'scoped memory for tpu_custom_call.1']
    #allocation4 [shape = 's32[1]{0}', space=sflag, size = 0x4, scoped, tag = 'scoped memory for tpu_custom_call.1']
    #allocation5 [shape = 'u8[4096]{0}', space=vmem, size = 0x1000, scoped, tag = 'input window, operand 1, single buffered']
    #allocation6 [shape = 's32[1]{0}', space=sflag, size = 0x4, scoped, tag = 'scoped memory for tpu_custom_call.1']
    #allocation7 [shape = 'u8[65536]{0}', space=vmem, size = 0x10000, scoped, tag = 'input window, operand 2, single buffered']
    #allocation8 [shape = 'u8[4096]{0}', space=vmem, size = 0x1000, scoped, tag = 'output window, operand 0, single buffered']
    %8 = vsyncpa [#allocation3], 0
    %9 = vsyncpa [#allocation6], 0
    %10 = vsyncpa [#allocation4], 0
    // Predicated region
    $region2: #{tpu_custom_call.1} parent=1 // pred_check
      _
    $region3: #{tpu_custom_call.1} parent=1 // pred_check_branch
      %12 = sbr.rel (0) target = $region5
    $region4: #{tpu_custom_call.1} parent=1 // pred_region
      %s14 = ssub.s32 128, 128
      %15 = vsyncadd [#allocation3], %s14
      %s17 = sshll.u32 [#allocation2], 4
      %s18 = int_to_ptr.vmem [resolvable:$true] %s17
      %20 = dma.hbm_to_vmem [thread:$0]  %s0, 128, %s18, [#allocation3]
    $region5: #{tpu_custom_call.1} parent=1 // pred_fallthru
      _
    // Predicated region
    $region6: #{tpu_custom_call.1} parent=1 // pred_check
      _
    $region7: #{tpu_custom_call.1} parent=1 // pred_check_branch
      %22 = sbr.rel (0) target = $region9
    $region8: #{tpu_custom_call.1} parent=1 // pred_region
      %s24 = ssub.s32 128, 128
      %25 = vsyncadd [#allocation6], %s24
      %s27 = sshll.u32 [#allocation5], 4
      %s28 = int_to_ptr.vmem [resolvable:$true] %s27
      %30 = dma.hbm_to_vmem [thread:$0]  %s1, 128, %s28, [#allocation6]
    $region9: #{tpu_custom_call.1} parent=1 // pred_fallthru
      _
    // Predicated region
    $region10: #{tpu_custom_call.1} parent=1 // pred_check
      _
    $region11: #{tpu_custom_call.1} parent=1 // pred_check_branch
      %32 = sbr.rel (0) target = $region13
    $region12: #{tpu_custom_call.1} parent=1 // pred_region
      %s34 = ssub.s32 2048, 2048
      %35 = vsyncadd [#allocation6], %s34
      %s36 = sshll.u32 [#allocation7], 4
      %s37 = int_to_ptr.vmem [resolvable:$true] %s36
      %42 = dma.hbm_to_vmem [thread:$0]  %s2, 2048, %s37, [#allocation6], 128, 128, 8
    $region13: #{tpu_custom_call.1} parent=1 // pred_fallthru
      _
    // Predicated region
    $region14: #{tpu_custom_call.1} parent=1 // pred_check
      _
    $region15: #{tpu_custom_call.1} parent=1 // pred_check_branch
      %44 = sbr.rel (0) target = $region17
    $region16: #{tpu_custom_call.1} parent=1 // pred_region
      %45 = dma.done [#allocation3], 128
    $region17: #{tpu_custom_call.1} parent=1 // pred_fallthru
      _
    // Predicated region
    $region18: #{tpu_custom_call.1} parent=1 // pred_check
      _
    $region19: #{tpu_custom_call.1} parent=1 // pred_check_branch
      %47 = sbr.rel (0) target = $region21
    $region20: #{tpu_custom_call.1} parent=1 // pred_region
      %48 = dma.done [#allocation6], 128
    $region21: #{tpu_custom_call.1} parent=1 // pred_fallthru
      _
    // Predicated region
    $region22: #{tpu_custom_call.1} parent=1 // pred_check
      _
    $region23: #{tpu_custom_call.1} parent=1 // pred_check_branch
      %50 = sbr.rel (0) target = $region25
    $region24: #{tpu_custom_call.1} parent=1 // pred_region
      %51 = dma.done [#allocation6], 2048
    $region25: #{tpu_custom_call.1} parent=1 // pred_fallthru
      _
    %v52 = vld [vmem:[#allocation2] sm:$0xff]
    %v53 = vld [vmem:[#allocation5] sm:$0xff]
    %v54 = vld [vmem:[#allocation7] sm:$0xff]
    %v55 = vld [vmem:[#allocation7 + $0x8] sm:$0xff]
    %v56 = vld [vmem:[#allocation7 + $0x10] sm:$0xff]
    %v57 = vld [vmem:[#allocation7 + $0x18] sm:$0xff]
    %v58 = vld [vmem:[#allocation7 + $0x20] sm:$0xff]
    %v59 = vld [vmem:[#allocation7 + $0x28] sm:$0xff]
    %v60 = vld [vmem:[#allocation7 + $0x30] sm:$0xff]
    %v61 = vld [vmem:[#allocation7 + $0x38] sm:$0xff]
    %v62 = vld [vmem:[#allocation7 + $0x40] sm:$0xff]
    %v63 = vld [vmem:[#allocation7 + $0x48] sm:$0xff]
    %v64 = vld [vmem:[#allocation7 + $0x50] sm:$0xff]
    %v65 = vld [vmem:[#allocation7 + $0x58] sm:$0xff]
    %v66 = vld [vmem:[#allocation7 + $0x60] sm:$0xff]
    %v67 = vld [vmem:[#allocation7 + $0x68] sm:$0xff]
    %v68 = vld [vmem:[#allocation7 + $0x70] sm:$0xff]
    %v69 = vld [vmem:[#allocation7 + $0x78] sm:$0xff]
    %v70 = vmax.f32 %v54, 0.0
    %v71 = vmax.f32 %v55, 0.0
    %v72 = vmax.f32 %v56, 0.0
    %v73 = vmax.f32 %v57, 0.0
    %v74 = vmax.f32 %v58, 0.0
    %v75 = vmax.f32 %v59, 0.0
    %v76 = vmax.f32 %v60, 0.0
    %v77 = vmax.f32 %v61, 0.0
    %v78 = vmax.f32 %v62, 0.0
    %v79 = vmax.f32 %v63, 0.0
    %v80 = vmax.f32 %v64, 0.0
    %v81 = vmax.f32 %v65, 0.0
    %v82 = vmax.f32 %v66, 0.0
    %v83 = vmax.f32 %v67, 0.0
    %v84 = vmax.f32 %v68, 0.0
    %v85 = vmax.f32 %v69, 0.0
    %86 = vmatprep.subr.mxu0 0.0
    %87 = vmatpush1.xpose.msra.mxu0 %v70
    %88 = vmatprep.subr.mxu0 0.0
    %89 = vmatpush1.xpose.msra.mxu0 %v71
    %90 = vmatprep.subr.mxu0 0.0
    %91 = vmatpush1.xpose.msra.mxu0 %v72
    %92 = vmatprep.subr.mxu0 0.0
    %93 = vmatpush1.xpose.msra.mxu0 %v73
    %94 = vmatprep.subr.mxu0 0.0
    %95 = vmatpush1.xpose.msra.mxu0 %v74
    %96 = vmatprep.subr.mxu0 0.0
    %97 = vmatpush1.xpose.msra.mxu0 %v75
    %98 = vmatprep.subr.mxu0 0.0
    %99 = vmatpush1.xpose.msra.mxu0 %v76
    %100 = vmatprep.subr.mxu0 0.0
    %101 = vmatpush1.xpose.msra.mxu0 %v77
    %102 = vmatprep.subr.mxu0 0.0
    %103 = vmatpush1.xpose.msra.mxu0 %v78
    %104 = vmatprep.subr.mxu0 0.0
    %105 = vmatpush1.xpose.msra.mxu0 %v79
    %106 = vmatprep.subr.mxu0 0.0
    %107 = vmatpush1.xpose.msra.mxu0 %v80
    %108 = vmatprep.subr.mxu0 0.0
    %109 = vmatpush1.xpose.msra.mxu0 %v81
    %110 = vmatprep.subr.mxu0 0.0
    %111 = vmatpush1.xpose.msra.mxu0 %v82
    %112 = vmatprep.subr.mxu0 0.0
    %113 = vmatpush1.xpose.msra.mxu0 %v83
    %114 = vmatprep.subr.mxu0 0.0
    %115 = vmatpush1.xpose.msra.mxu0 %v84
    %116 = vmatprep.subr.mxu0 0.0
    %117 = vmatpush1.xpose.msra.mxu0 %v85
    %118 = vmatprep.subr.mxu0 0.0
    %119 = vmatpush1.xpose.msra.mxu0 0.0
    %120 = vmatprep.subr.mxu0 0.0
    %121 = vmatpush1.xpose.msra.mxu0 0.0
    %122 = vmatprep.subr.mxu0 0.0
    %123 = vmatpush1.xpose.msra.mxu0 0.0
    %124 = vmatprep.subr.mxu0 0.0
    %125 = vmatpush1.xpose.msra.mxu0 0.0
    %126 = vmatprep.subr.mxu0 0.0
    %127 = vmatpush1.xpose.msra.mxu0 0.0
    %128 = vmatprep.subr.mxu0 0.0
    %129 = vmatpush1.xpose.msra.mxu0 0.0
    %130 = vmatprep.subr.mxu0 0.0
    %131 = vmatpush1.xpose.msra.mxu0 0.0
    %132 = vmatprep.subr.mxu0 0.0
    %133 = vmatpush1.xpose.msra.mxu0 0.0
    %134 = vmatprep.subr.mxu0 0.0
    %135 = vmatpush1.xpose.msra.mxu0 0.0
    %136 = vmatprep.subr.mxu0 0.0
    %137 = vmatpush1.xpose.msra.mxu0 0.0
    %138 = vmatprep.subr.mxu0 0.0
    %139 = vmatpush1.xpose.msra.mxu0 0.0
    %140 = vmatprep.subr.mxu0 0.0
    %141 = vmatpush1.xpose.msra.mxu0 0.0
    %142 = vmatprep.subr.mxu0 0.0
    %143 = vmatpush1.xpose.msra.mxu0 0.0
    %144 = vmatprep.subr.mxu0 0.0
    %145 = vmatpush1.xpose.msra.mxu0 0.0
    %146 = vmatprep.subr.mxu0 0.0
    %147 = vmatpush1.xpose.msra.mxu0 0.0
    %148 = vmatprep.subr.mxu0 0.0
    %149 = vmatpush1.xpose.msra.mxu0 0.0
    %150 = vmatprep.mubr.f32.mxu0 0.0
    %151 = vmatmul.mubr.f32.gmra.mrb[0].mxu0 %v52
    %v152 = vpop.f32.mrb[0].mxu0
    %v153 = vadd.f32 1e-05, %v152
    %v154 = vpop.f32.mrb[0].mxu0
    %155 = vdwg.mxu0
    %v156 = vrcp.pop %v153
    %v157 = vmul.f32 %v53, %v156
    %158 = vmatprep.subr.mxu0 0.0
    %159 = vmatpush1.msra.mxu0 %v70
    %160 = vmatprep.subr.mxu0 0.0
    %161 = vmatpush1.msra.mxu0 %v71
    %162 = vmatprep.subr.mxu0 0.0
    %163 = vmatpush1.msra.mxu0 %v72
    %164 = vmatprep.subr.mxu0 0.0
    %165 = vmatpush1.msra.mxu0 %v73
    %166 = vmatprep.subr.mxu0 0.0
    %167 = vmatpush1.msra.mxu0 %v74
    %168 = vmatprep.subr.mxu0 0.0
    %169 = vmatpush1.msra.mxu0 %v75
    %170 = vmatprep.subr.mxu0 0.0
    %171 = vmatpush1.msra.mxu0 %v76
    %172 = vmatprep.subr.mxu0 0.0
    %173 = vmatpush1.msra.mxu0 %v77
    %174 = vmatprep.subr.mxu0 0.0
    %175 = vmatpush1.msra.mxu0 %v78
    %176 = vmatprep.subr.mxu0 0.0
    %177 = vmatpush1.msra.mxu0 %v79
    %178 = vmatprep.subr.mxu0 0.0
    %179 = vmatpush1.msra.mxu0 %v80
    %180 = vmatprep.subr.mxu0 0.0
    %181 = vmatpush1.msra.mxu0 %v81
    %182 = vmatprep.subr.mxu0 0.0
    %183 = vmatpush1.msra.mxu0 %v82
    %184 = vmatprep.subr.mxu0 0.0
    %185 = vmatpush1.msra.mxu0 %v83
    %186 = vmatprep.subr.mxu0 0.0
    %187 = vmatpush1.msra.mxu0 %v84
    %188 = vmatprep.subr.mxu0 0.0
    %189 = vmatpush1.msra.mxu0 %v85
    %190 = vmatprep.subr.mxu0 0.0
    %191 = vmatpush1.msra.mxu0 0.0
    %192 = vmatprep.subr.mxu0 0.0
    %193 = vmatpush1.msra.mxu0 0.0
    %194 = vmatprep.subr.mxu0 0.0
    %195 = vmatpush1.msra.mxu0 0.0
    %196 = vmatprep.subr.mxu0 0.0
    %197 = vmatpush1.msra.mxu0 0.0
    %198 = vmatprep.subr.mxu0 0.0
    %199 = vmatpush1.msra.mxu0 0.0
    %200 = vmatprep.subr.mxu0 0.0
    %201 = vmatpush1.msra.mxu0 0.0
    %202 = vmatprep.subr.mxu0 0.0
    %203 = vmatpush1.msra.mxu0 0.0
    %204 = vmatprep.subr.mxu0 0.0
    %205 = vmatpush1.msra.mxu0 0.0
    %206 = vmatprep.subr.mxu0 0.0
    %207 = vmatpush1.msra.mxu0 0.0
    %208 = vmatprep.subr.mxu0 0.0
    %209 = vmatpush1.msra.mxu0 0.0
    %210 = vmatprep.subr.mxu0 0.0
    %211 = vmatpush1.msra.mxu0 0.0
    %212 = vmatprep.subr.mxu0 0.0
    %213 = vmatpush1.msra.mxu0 0.0
    %214 = vmatprep.subr.mxu0 0.0
    %215 = vmatpush1.msra.mxu0 0.0
    %216 = vmatprep.subr.mxu0 0.0
    %217 = vmatpush1.msra.mxu0 0.0
    %218 = vmatprep.subr.mxu0 0.0
    %219 = vmatpush1.msra.mxu0 0.0
    %220 = vmatprep.subr.mxu0 0.0
    %221 = vmatpush1.msra.mxu0 0.0
    %222 = vmatprep.mubr.f32.mxu0 0.0
    %223 = vmatmul.mubr.f32.gmra.mrb[0].mxu0 %v157
    %v224 = vpop.f32.mrb[0].mxu0
    %v225 = vadd.f32 0.0, %v224
    %v226 = vpop.f32.mrb[0].mxu0
    %227 = vdwg.mxu0
    %v228 = vmul.f32 %v52, %v225
    %229 = vst [vmem:[#allocation8] sm:$0xff] %v228
    // Predicated region
    $region26: #{tpu_custom_call.1} parent=1 // pred_check
      _
    $region27: #{tpu_custom_call.1} parent=1 // pred_check_branch
      %231 = sbr.rel (0) target = $region29
    $region28: #{tpu_custom_call.1} parent=1 // pred_region
      %s233 = ssub.s32 128, 128
      %234 = vsyncadd [#allocation4], %s233
      %s236 = sshll.u32 [#allocation8], 4
      %s237 = int_to_ptr.vmem [resolvable:$true] %s236
      %239 = dma.vmem_to_hbm [thread:$0]  %s237, 128, %s3, [#allocation4]
    $region29: #{tpu_custom_call.1} parent=1 // pred_fallthru
      _
    // Predicated region
    $region30: #{tpu_custom_call.1} parent=1 // pred_check
      _
    $region31: #{tpu_custom_call.1} parent=1 // pred_check_branch
      %241 = sbr.rel (0) target = $region33
    $region32: #{tpu_custom_call.1} parent=1 // pred_region
      %242 = dma.done [#allocation4], 128
    $region33: #{tpu_custom_call.1} parent=1 // pred_fallthru
      _
    %243 = vsyncpa [#allocation3], 1
    %244 = vsyncpa [#allocation6], 1
    %245 = vsyncpa [#allocation4], 1

</llo_original>
